<compile_context>
chip_gen: v6e
topology: v6e:2x2x1
jax: 0.10.0
libtpu: 0.0.40
codegen_flags: <defaults>
</compile_context>

<pallas_src>
import functools
import math

import jax
import jax.numpy as jnp
from jax import lax
from jax.experimental import pallas as pl
from jax.experimental.pallas import tpu as pltpu


def _round_up(n, m):
    return ((n + m - 1) // m) * m


def _num_tensorcores():
    """Best-effort TensorCore count of the local device (v7x has 2)."""
    try:
        d = jax.devices()[0]
        n = getattr(d, "num_cores", None)
        if n:
            return max(1, int(n))
        kind = str(getattr(d, "device_kind", "")).lower()
        return 2 if ("v7" in kind or "7x" in kind) else 1
    except Exception:
        return 1


def _vmem_capacity_bytes():
    """Physical VMEM per TensorCore; conservative fallback if query fails."""
    try:
        return int(pltpu.get_tpu_info().vmem_capacity_bytes)
    except Exception:
        return 64 << 20  # v7x per-TC VMEM (smallest of the targets)


def _gru_recurrence_kernel(x_ref, pt_ref, b_ref, wt_ref, z_ref, out_ref, u_ref,
                           *, t_s, s_total, unroll):
    """One grid step == one (batch tile, time chunk).

    x_ref  : (t_s, b_tile, I)      raw input chunk (time-major inside the chunk)
    pt_ref : (I, H_pad)            P_r^T   (VMEM-resident, constant index_map)
    b_ref  : (1, H_pad)            b_r row
    wt_ref : (H_pad, H_pad)        W_r^T   (VMEM-resident, constant index_map)
    z_ref  : (1, H_pad)            z = clamp(dt,0,1) * sigmoid(g_z)
    out_ref: (b_tile, H_pad)       hidden state; accumulator across time chunks
    u_ref  : (t_s, b_tile, H_pad)  VMEM scratch for this chunk's projection
    """
    c = pl.program_id(1)  # time-chunk axis (innermost, "arbitrary")

    @pl.when(c == 0)
    def _():
        out_ref[...] = jnp.zeros_like(out_ref)

    t_dim, b_tile, i_dim = x_ref.shape
    h_pad = out_ref.shape[-1]

    # Fused, time-parallel input projection for the whole chunk: one large,
    # MXU-friendly matmul off the serial path.  Leading dims merge for free
    # because b_tile is a multiple of 8 (sublane-aligned).
    x_flat = x_ref[...].reshape(t_dim * b_tile, i_dim)
    u = jnp.dot(x_flat, pt_ref[...], preferred_element_type=jnp.float32) + b_ref[...]
    u_ref[...] = u.reshape(t_dim, b_tile, h_pad)

    # Keep the gate as a single (1, H_pad) row; elementwise ops sublane-
    # broadcast it.  No full-tile gate broadcast, no (1 - z) term.
    z_row = z_ref[...]

    def step(t, h):
        pre = jnp.dot(h, wt_ref[...], preferred_element_type=jnp.float32) + u_ref[t]
        # (1 - z) * h + z * tanh(pre)  ==  h + z * (tanh(pre) - h)
        return h + z_row * (jnp.tanh(pre) - h)

    if s_total % t_s == 0:
        # Every chunk is full: static trip count, unrolled for LLO scheduling.
        out_ref[...] = lax.fori_loop(0, t_s, step, out_ref[...], unroll=unroll)
    else:
        last = pl.num_programs(1) - 1

        @pl.when(c != last)
        def _():
            out_ref[...] = lax.fori_loop(0, t_s, step, out_ref[...], unroll=unroll)

        @pl.when(c == last)
        def _():
            # Only the final chunk is partial: dynamic trip count, never
            # consumes the zero-padded timesteps.
            n_valid = s_total - c * t_s
            out_ref[...] = lax.fori_loop(0, n_valid, step, out_ref[...])


def custom_gru_forward(x_bsi, w_r, p_r, b_r, g_z, dt, *, time_block=256, unroll=8):
    """x_bsi: (B, S, I) batch_first input.  Returns final hidden state (B, H)."""
    B, S, I = x_bsi.shape
    H = w_r.shape[0]
    f32 = jnp.float32

    if S == 0:  # h_0 = 0; nothing to recur over
        return jnp.zeros((B, H), dtype=f32)

    # ---- parameter setup (plain JAX glue, not the hot path) ------------------
    x = x_bsi.astype(f32)
    wt = jnp.transpose(w_r).astype(f32)                    # (H, H): h @ W^T == (W h)^T
    pt = jnp.transpose(p_r).astype(f32)                    # (I, H)
    bias = jnp.reshape(b_r.astype(f32), (H,))              # (H,)
    z = (jnp.clip(dt, 0.0, 1.0).astype(f32)
         * jax.nn.sigmoid(g_z.astype(f32))).reshape(H)     # (H,)

    # ---- lane/sublane alignment: hidden -> x128 (lanes), batch -> x8 ---------
    H_pad = _round_up(H, 128)
    B_pad = _round_up(B, 8)

    # ---- batch tiling: >= 2 tiles on multi-TC chips (v7x) so the "parallel"
    # axis shards across TensorCores; one big tile on single-TC chips.
    n_cores = _num_tensorcores()
    if n_cores > 1 and B_pad >= 16:
        n_btiles = min(n_cores, B_pad // 8)
    elif B_pad > 128:
        n_btiles = pl.cdiv(B_pad, 128)
    else:
        n_btiles = 1
    b_tile = _round_up(pl.cdiv(B_pad, n_btiles), 8)
    B_pad = b_tile * n_btiles

    # ---- time chunk sized to the chip's VMEM budget --------------------------
    # double-buffered x chunk + u scratch + (double-buffered) weights/gate/out
    vmem_cap = _vmem_capacity_bytes()
    budget = int(vmem_cap * 0.7)                           # headroom for compiler scratch
    fixed = 4 * (2 * (H_pad * H_pad + I * H_pad + 2 * H_pad) + 2 * b_tile * H_pad)
    per_t = 4 * b_tile * (2 * I + H_pad)
    t_cap = max(8, (budget - fixed) // max(per_t, 1))
    t_s = int(min(time_block, S, t_cap))
    n_chunks = int(pl.cdiv(S, t_s))
    S_pad = n_chunks * t_s
    unroll_n = max(1, min(unroll, t_s))
    vmem_limit = int(min(vmem_cap - (4 << 20),
                         max(fixed + per_t * t_s + (4 << 20), 32 << 20)))

    # ---- pad & lay out inputs (no u materialization, x only) ----------------
    # x -> (n_btiles, S_pad, b_tile, I): each (t_s, b_tile, I) chunk block is
    # contiguous in HBM regardless of the batch-tile count.  Time padding is
    # never consumed (final-chunk loop stops at the true sequence length).
    x_p = jnp.pad(x, ((0, B_pad - B), (0, S_pad - S), (0, 0)))
    x_tiled = jnp.transpose(x_p.reshape(n_btiles, b_tile, S_pad, I), (0, 2, 1, 3))
    pt_p = jnp.pad(pt, ((0, 0), (0, H_pad - H)))
    bias_p = jnp.pad(bias, (0, H_pad - H)).reshape(1, H_pad)   # zero bias on pad lanes
    wt_p = jnp.pad(wt, ((0, H_pad - H), (0, H_pad - H)))       # zero rows/cols on pad lanes
    z_p = jnp.pad(z, (0, H_pad - H)).reshape(1, H_pad)         # z=0 on pad lanes -> h stays 0

    kernel = functools.partial(
        _gru_recurrence_kernel, t_s=t_s, s_total=S, unroll=unroll_n)

    grid_spec = pltpu.PrefetchScalarGridSpec(
        num_scalar_prefetch=0,
        grid=(n_btiles, n_chunks),
        in_specs=[
            pl.BlockSpec((None, t_s, b_tile, I), lambda b, c: (b, c, 0, 0)),  # x chunk
            pl.BlockSpec((I, H_pad), lambda b, c: (0, 0)),                    # P_r^T
            pl.BlockSpec((1, H_pad), lambda b, c: (0, 0)),                    # b_r
            pl.BlockSpec((H_pad, H_pad), lambda b, c: (0, 0)),                # W_r^T
            pl.BlockSpec((1, H_pad), lambda b, c: (0, 0)),                    # z
        ],
        out_specs=pl.BlockSpec((b_tile, H_pad), lambda b, c: (b, 0)),
        scratch_shapes=[pltpu.VMEM((t_s, b_tile, H_pad), jnp.float32)],
    )

    out_pad = pl.pallas_call(
        kernel,
        out_shape=jax.ShapeDtypeStruct((B_pad, H_pad), f32),
        grid_spec=grid_spec,
        compiler_params=pltpu.CompilerParams(
            dimension_semantics=("parallel", "arbitrary"),  # batch ∥, time serial
            vmem_limit_bytes=vmem_limit,
        ),
    )(x_tiled, pt_p, bias_p, wt_p, z_p)

    return out_pad[:B, :H]


def custom_gru_reference(x_bsi, w_r, p_r, b_r, g_z, dt):
    """Pure-JAX reference mirroring the PyTorch loop (h kept as (H, B))."""
    B, S, I = x_bsi.shape
    H = w_r.shape[0]
    z = jnp.clip(dt, 0.0, 1.0) * jax.nn.sigmoid(g_z)       # (H, 1)
    h = jnp.zeros((H, B), dtype=jnp.float32)
    for n in range(S):
        x_t = jnp.transpose(x_bsi[:, n, :])                # (I, B)
        h = (1.0 - z) * h + z * jnp.tanh(w_r @ h + p_r @ x_t + b_r)
    return jnp.transpose(h)                                # (B, H)


if __name__ == "__main__":
    # Shapes consistent with the module: input_size=28, hidden_size=48.
    B, S, I, H = 4, 8, 28, 48

    key = jax.random.PRNGKey(0)
    k_x, k_w, k_p, k_b, k_g, k_dt = jax.random.split(key, 6)

    a = 1.0 / math.sqrt(H)   # uniform(-1/sqrt(H), 1/sqrt(H)) init as in the module
    x = jax.random.normal(k_x, (B, S, I), dtype=jnp.float32)
    w_r = jax.random.uniform(k_w, (H, H), minval=-a, maxval=a, dtype=jnp.float32)
    p_r = jax.random.uniform(k_p, (H, I), minval=-a, maxval=a, dtype=jnp.float32)
    b_r = jax.random.uniform(k_b, (H, 1), minval=-a, maxval=a, dtype=jnp.float32)
    g_z = jax.random.uniform(k_g, (H, 1), minval=-a, maxval=a, dtype=jnp.float32)
    # dt is clamped to [0, 1] in forward; sample it in-range so the gate is active.
    dt = jax.random.uniform(k_dt, (), minval=0.0, maxval=1.0, dtype=jnp.float32)

    out = jax.block_until_ready(custom_gru_forward(x, w_r, p_r, b_r, g_z, dt))
    ref = custom_gru_reference(x, w_r, p_r, b_r, g_z, dt)

    assert out.shape == (B, H)
    assert jnp.allclose(out, ref, atol=1e-4, rtol=1e-4), "mismatch vs reference"

    print("KERNEL_OK")
</pallas_src>

<mosaic_0001>
module attributes {stable_mosaic.version = 11 : i64} {
  func.func @_gru_recurrence_kernel(%arg0: i32, %arg1: i32, %arg2: memref<1x8x8x28xf32, #tpu.memory_space<vmem>>, %arg3: memref<28x128xf32, #tpu.memory_space<vmem>>, %arg4: memref<1x128xf32, #tpu.memory_space<vmem>>, %arg5: memref<128x128xf32, #tpu.memory_space<vmem>>, %arg6: memref<1x128xf32, #tpu.memory_space<vmem>>, %arg7: memref<8x128xf32, #tpu.memory_space<vmem>>, %arg8: memref<8x8x128xf32, #tpu.memory_space<vmem>>) attributes {dimension_semantics = [#tpu.dimension_semantics<parallel>, #tpu.dimension_semantics<arbitrary>], iteration_bounds = array<i64: 1, 1>, scalar_prefetch = 0 : i64, scratch_operands = 1 : i64, tpu.core_type = #tpu.core_type<tc>, window_params = [{transform_indices = @transform_0, window_bounds = array<i64: 1, 8, 8, 28>}, {pipeline_mode = #tpu.pipeline_mode<synchronous>, transform_indices = @transform_1, window_bounds = array<i64: 28, 128>}, {pipeline_mode = #tpu.pipeline_mode<synchronous>, transform_indices = @transform_2, window_bounds = array<i64: 1, 128>}, {pipeline_mode = #tpu.pipeline_mode<synchronous>, transform_indices = @transform_3, window_bounds = array<i64: 128, 128>}, {pipeline_mode = #tpu.pipeline_mode<synchronous>, transform_indices = @transform_4, window_bounds = array<i64: 1, 128>}, {transform_indices = @transform_5, window_bounds = array<i64: 8, 128>}]} {
    %c0_i32 = arith.constant 0 : i32
    %0 = arith.cmpi eq, %arg1, %c0_i32 : i32
    %1 = arith.extui %0 : i1 to i32
    %c0_i32_0 = arith.constant 0 : i32
    %2 = arith.cmpi ne, %1, %c0_i32_0 : i32
    scf.if %2 {
      %cst_58 = arith.constant 0.000000e+00 : f32
      %104 = vector.broadcast %cst_58 : f32 to vector<8x128xf32>
      %c0_59 = arith.constant 0 : index
      %c0_60 = arith.constant 0 : index
      %105 = vector.load %arg7[%c0_59, %c0_60] : memref<8x128xf32, #tpu.memory_space<vmem>>, vector<8x128xf32>
      tpu.vector_store %arg7[%c0_59, %c0_60], %104 {strides = array<i32>} : memref<8x128xf32, #tpu.memory_space<vmem>>, vector<8x128xf32>,
    } else {
    }
    %c0 = arith.constant 0 : index
    %c0_1 = arith.constant 0 : index
    %c0_2 = arith.constant 0 : index
    %c0_3 = arith.constant 0 : index
    %3 = vector.load %arg2[%c0, %c0_1, %c0_2, %c0_3] : memref<1x8x8x28xf32, #tpu.memory_space<vmem>>, vector<1x8x8x28xf32>
    %4 = vector.shape_cast %3 : vector<1x8x8x28xf32> to vector<8x8x28xf32>
    %5 = vector.shape_cast %4 : vector<8x8x28xf32> to vector<64x28xf32>
    %c0_4 = arith.constant 0 : index
    %c0_5 = arith.constant 0 : index
    %6 = vector.load %arg3[%c0_4, %c0_5] : memref<28x128xf32, #tpu.memory_space<vmem>>, vector<28x128xf32>
    %cst = arith.constant dense<0.000000e+00> : vector<64x128xf32>
    %7 = tpu.matmul %5, %6, %cst {dimension_numbers = #tpu.dot_dimension_numbers<[1], [0], [0], [1], [0, 0, 1, 1], [], []>} : vector<64x28xf32>, vector<28x128xf32>, vector<64x128xf32> -> vector<64x128xf32>
    %c0_6 = arith.constant 0 : index
    %c0_7 = arith.constant 0 : index
    %8 = vector.load %arg4[%c0_6, %c0_7] : memref<1x128xf32, #tpu.memory_space<vmem>>, vector<1x128xf32>
    %9 = vector.broadcast %8 : vector<1x128xf32> to vector<64x128xf32>
    %10 = arith.addf %7, %9 : vector<64x128xf32>
    %11 = vector.shape_cast %10 : vector<64x128xf32> to vector<8x8x128xf32>
    %c0_8 = arith.constant 0 : index
    %c0_9 = arith.constant 0 : index
    %c0_10 = arith.constant 0 : index
    %12 = vector.load %arg8[%c0_8, %c0_9, %c0_10] : memref<8x8x128xf32, #tpu.memory_space<vmem>>, vector<8x8x128xf32>
    tpu.vector_store %arg8[%c0_8, %c0_9, %c0_10], %11 {strides = array<i32>} : memref<8x8x128xf32, #tpu.memory_space<vmem>>, vector<8x8x128xf32>,
    %c0_11 = arith.constant 0 : index
    %c0_12 = arith.constant 0 : index
    %13 = vector.load %arg6[%c0_11, %c0_12] : memref<1x128xf32, #tpu.memory_space<vmem>>, vector<1x128xf32>
    %c0_13 = arith.constant 0 : index
    %c0_14 = arith.constant 0 : index
    %14 = vector.load %arg7[%c0_13, %c0_14] : memref<8x128xf32, #tpu.memory_space<vmem>>, vector<8x128xf32>
    %c0_i32_15 = arith.constant 0 : i32
    %c0_16 = arith.constant 0 : index
    %c0_17 = arith.constant 0 : index
    %15 = vector.load %arg5[%c0_16, %c0_17] : memref<128x128xf32, #tpu.memory_space<vmem>>, vector<128x128xf32>
    %cst_18 = arith.constant dense<0.000000e+00> : vector<8x128xf32>
    %16 = tpu.matmul %14, %15, %cst_18 {dimension_numbers = #tpu.dot_dimension_numbers<[1], [0], [0], [1], [0, 0, 1, 1], [], []>} : vector<8x128xf32>, vector<128x128xf32>, vector<8x128xf32> -> vector<8x128xf32>
    %17 = arith.index_cast %c0_i32_15 : i32 to index
    %c0_19 = arith.constant 0 : index
    %c0_20 = arith.constant 0 : index
    %18 = vector.load %arg8[%17, %c0_19, %c0_20] : memref<8x8x128xf32, #tpu.memory_space<vmem>>, vector<1x8x128xf32>
    %19 = vector.shape_cast %18 : vector<1x8x128xf32> to vector<8x128xf32>
    %20 = arith.addf %16, %19 : vector<8x128xf32>
    %21 = math.tanh %20 : vector<8x128xf32>
    %22 = arith.subf %21, %14 : vector<8x128xf32>
    %23 = vector.broadcast %13 : vector<1x128xf32> to vector<8x128xf32>
    %24 = arith.mulf %23, %22 : vector<8x128xf32>
    %25 = arith.addf %14, %24 : vector<8x128xf32>
    %c1_i32 = arith.constant 1 : i32
    %c0_21 = arith.constant 0 : index
    %c0_22 = arith.constant 0 : index
    %26 = vector.load %arg5[%c0_21, %c0_22] : memref<128x128xf32, #tpu.memory_space<vmem>>, vector<128x128xf32>
    %cst_23 = arith.constant dense<0.000000e+00> : vector<8x128xf32>
    %27 = tpu.matmul %25, %26, %cst_23 {dimension_numbers = #tpu.dot_dimension_numbers<[1], [0], [0], [1], [0, 0, 1, 1], [], []>} : vector<8x128xf32>, vector<128x128xf32>, vector<8x128xf32> -> vector<8x128xf32>
    %28 = arith.index_cast %c1_i32 : i32 to index
    %c0_24 = arith.constant 0 : index
    %c0_25 = arith.constant 0 : index
    %29 = vector.load %arg8[%28, %c0_24, %c0_25] : memref<8x8x128xf32, #tpu.memory_space<vmem>>, vector<1x8x128xf32>
    %30 = vector.shape_cast %29 : vector<1x8x128xf32> to vector<8x128xf32>
    %31 = arith.addf %27, %30 : vector<8x128xf32>
    %32 = math.tanh %31 : vector<8x128xf32>
    %33 = arith.subf %32, %25 : vector<8x128xf32>
    %34 = vector.broadcast %13 : vector<1x128xf32> to vector<8x128xf32>
    %35 = arith.mulf %34, %33 : vector<8x128xf32>
    %36 = arith.addf %25, %35 : vector<8x128xf32>
    %c2_i32 = arith.constant 2 : i32
    %c0_26 = arith.constant 0 : index
    %c0_27 = arith.constant 0 : index
    %37 = vector.load %arg5[%c0_26, %c0_27] : memref<128x128xf32, #tpu.memory_space<vmem>>, vector<128x128xf32>
    %cst_28 = arith.constant dense<0.000000e+00> : vector<8x128xf32>
    %38 = tpu.matmul %36, %37, %cst_28 {dimension_numbers = #tpu.dot_dimension_numbers<[1], [0], [0], [1], [0, 0, 1, 1], [], []>} : vector<8x128xf32>, vector<128x128xf32>, vector<8x128xf32> -> vector<8x128xf32>
    %39 = arith.index_cast %c2_i32 : i32 to index
    %c0_29 = arith.constant 0 : index
    %c0_30 = arith.constant 0 : index
    %40 = vector.load %arg8[%39, %c0_29, %c0_30] : memref<8x8x128xf32, #tpu.memory_space<vmem>>, vector<1x8x128xf32>
    %41 = vector.shape_cast %40 : vector<1x8x128xf32> to vector<8x128xf32>
    %42 = arith.addf %38, %41 : vector<8x128xf32>
    %43 = math.tanh %42 : vector<8x128xf32>
    %44 = arith.subf %43, %36 : vector<8x128xf32>
    %45 = vector.broadcast %13 : vector<1x128xf32> to vector<8x128xf32>
    %46 = arith.mulf %45, %44 : vector<8x128xf32>
    %47 = arith.addf %36, %46 : vector<8x128xf32>
    %c3_i32 = arith.constant 3 : i32
    %c0_31 = arith.constant 0 : index
    %c0_32 = arith.constant 0 : index
    %48 = vector.load %arg5[%c0_31, %c0_32] : memref<128x128xf32, #tpu.memory_space<vmem>>, vector<128x128xf32>
    %cst_33 = arith.constant dense<0.000000e+00> : vector<8x128xf32>
    %49 = tpu.matmul %47, %48, %cst_33 {dimension_numbers = #tpu.dot_dimension_numbers<[1], [0], [0], [1], [0, 0, 1, 1], [], []>} : vector<8x128xf32>, vector<128x128xf32>, vector<8x128xf32> -> vector<8x128xf32>
    %50 = arith.index_cast %c3_i32 : i32 to index
    %c0_34 = arith.constant 0 : index
    %c0_35 = arith.constant 0 : index
    %51 = vector.load %arg8[%50, %c0_34, %c0_35] : memref<8x8x128xf32, #tpu.memory_space<vmem>>, vector<1x8x128xf32>
    %52 = vector.shape_cast %51 : vector<1x8x128xf32> to vector<8x128xf32>
    %53 = arith.addf %49, %52 : vector<8x128xf32>
    %54 = math.tanh %53 : vector<8x128xf32>
    %55 = arith.subf %54, %47 : vector<8x128xf32>
    %56 = vector.broadcast %13 : vector<1x128xf32> to vector<8x128xf32>
    %57 = arith.mulf %56, %55 : vector<8x128xf32>
    %58 = arith.addf %47, %57 : vector<8x128xf32>
    %c4_i32 = arith.constant 4 : i32
    %c0_36 = arith.constant 0 : index
    %c0_37 = arith.constant 0 : index
    %59 = vector.load %arg5[%c0_36, %c0_37] : memref<128x128xf32, #tpu.memory_space<vmem>>, vector<128x128xf32>
    %cst_38 = arith.constant dense<0.000000e+00> : vector<8x128xf32>
    %60 = tpu.matmul %58, %59, %cst_38 {dimension_numbers = #tpu.dot_dimension_numbers<[1], [0], [0], [1], [0, 0, 1, 1], [], []>} : vector<8x128xf32>, vector<128x128xf32>, vector<8x128xf32> -> vector<8x128xf32>
    %61 = arith.index_cast %c4_i32 : i32 to index
    %c0_39 = arith.constant 0 : index
    %c0_40 = arith.constant 0 : index
    %62 = vector.load %arg8[%61, %c0_39, %c0_40] : memref<8x8x128xf32, #tpu.memory_space<vmem>>, vector<1x8x128xf32>
    %63 = vector.shape_cast %62 : vector<1x8x128xf32> to vector<8x128xf32>
    %64 = arith.addf %60, %63 : vector<8x128xf32>
    %65 = math.tanh %64 : vector<8x128xf32>
    %66 = arith.subf %65, %58 : vector<8x128xf32>
    %67 = vector.broadcast %13 : vector<1x128xf32> to vector<8x128xf32>
    %68 = arith.mulf %67, %66 : vector<8x128xf32>
    %69 = arith.addf %58, %68 : vector<8x128xf32>
    %c5_i32 = arith.constant 5 : i32
    %c0_41 = arith.constant 0 : index
    %c0_42 = arith.constant 0 : index
    %70 = vector.load %arg5[%c0_41, %c0_42] : memref<128x128xf32, #tpu.memory_space<vmem>>, vector<128x128xf32>
    %cst_43 = arith.constant dense<0.000000e+00> : vector<8x128xf32>
    %71 = tpu.matmul %69, %70, %cst_43 {dimension_numbers = #tpu.dot_dimension_numbers<[1], [0], [0], [1], [0, 0, 1, 1], [], []>} : vector<8x128xf32>, vector<128x128xf32>, vector<8x128xf32> -> vector<8x128xf32>
    %72 = arith.index_cast %c5_i32 : i32 to index
    %c0_44 = arith.constant 0 : index
    %c0_45 = arith.constant 0 : index
    %73 = vector.load %arg8[%72, %c0_44, %c0_45] : memref<8x8x128xf32, #tpu.memory_space<vmem>>, vector<1x8x128xf32>
    %74 = vector.shape_cast %73 : vector<1x8x128xf32> to vector<8x128xf32>
    %75 = arith.addf %71, %74 : vector<8x128xf32>
    %76 = math.tanh %75 : vector<8x128xf32>
    %77 = arith.subf %76, %69 : vector<8x128xf32>
    %78 = vector.broadcast %13 : vector<1x128xf32> to vector<8x128xf32>
    %79 = arith.mulf %78, %77 : vector<8x128xf32>
    %80 = arith.addf %69, %79 : vector<8x128xf32>
    %c6_i32 = arith.constant 6 : i32
    %c0_46 = arith.constant 0 : index
    %c0_47 = arith.constant 0 : index
    %81 = vector.load %arg5[%c0_46, %c0_47] : memref<128x128xf32, #tpu.memory_space<vmem>>, vector<128x128xf32>
    %cst_48 = arith.constant dense<0.000000e+00> : vector<8x128xf32>
    %82 = tpu.matmul %80, %81, %cst_48 {dimension_numbers = #tpu.dot_dimension_numbers<[1], [0], [0], [1], [0, 0, 1, 1], [], []>} : vector<8x128xf32>, vector<128x128xf32>, vector<8x128xf32> -> vector<8x128xf32>
    %83 = arith.index_cast %c6_i32 : i32 to index
    %c0_49 = arith.constant 0 : index
    %c0_50 = arith.constant 0 : index
    %84 = vector.load %arg8[%83, %c0_49, %c0_50] : memref<8x8x128xf32, #tpu.memory_space<vmem>>, vector<1x8x128xf32>
    %85 = vector.shape_cast %84 : vector<1x8x128xf32> to vector<8x128xf32>
    %86 = arith.addf %82, %85 : vector<8x128xf32>
    %87 = math.tanh %86 : vector<8x128xf32>
    %88 = arith.subf %87, %80 : vector<8x128xf32>
    %89 = vector.broadcast %13 : vector<1x128xf32> to vector<8x128xf32>
    %90 = arith.mulf %89, %88 : vector<8x128xf32>
    %91 = arith.addf %80, %90 : vector<8x128xf32>
    %c7_i32 = arith.constant 7 : i32
    %c0_51 = arith.constant 0 : index
    %c0_52 = arith.constant 0 : index
    %92 = vector.load %arg5[%c0_51, %c0_52] : memref<128x128xf32, #tpu.memory_space<vmem>>, vector<128x128xf32>
    %cst_53 = arith.constant dense<0.000000e+00> : vector<8x128xf32>
    %93 = tpu.matmul %91, %92, %cst_53 {dimension_numbers = #tpu.dot_dimension_numbers<[1], [0], [0], [1], [0, 0, 1, 1], [], []>} : vector<8x128xf32>, vector<128x128xf32>, vector<8x128xf32> -> vector<8x128xf32>
    %94 = arith.index_cast %c7_i32 : i32 to index
    %c0_54 = arith.constant 0 : index
    %c0_55 = arith.constant 0 : index
    %95 = vector.load %arg8[%94, %c0_54, %c0_55] : memref<8x8x128xf32, #tpu.memory_space<vmem>>, vector<1x8x128xf32>
    %96 = vector.shape_cast %95 : vector<1x8x128xf32> to vector<8x128xf32>
    %97 = arith.addf %93, %96 : vector<8x128xf32>
    %98 = math.tanh %97 : vector<8x128xf32>
    %99 = arith.subf %98, %91 : vector<8x128xf32>
    %100 = vector.broadcast %13 : vector<1x128xf32> to vector<8x128xf32>
    %101 = arith.mulf %100, %99 : vector<8x128xf32>
    %102 = arith.addf %91, %101 : vector<8x128xf32>
    %c8_i32 = arith.constant 8 : i32
    %c0_56 = arith.constant 0 : index
    %c0_57 = arith.constant 0 : index
    %103 = vector.load %arg7[%c0_56, %c0_57] : memref<8x128xf32, #tpu.memory_space<vmem>>, vector<8x128xf32>
    tpu.vector_store %arg7[%c0_56, %c0_57], %102 {strides = array<i32>} : memref<8x128xf32, #tpu.memory_space<vmem>>, vector<8x128xf32>,
    return
  }
  func.func @transform_0(%arg0: i32, %arg1: i32) -> (i32, i32, i32, i32) {
    %c0_i32 = arith.constant 0 : i32
    %c0_i32_0 = arith.constant 0 : i32
    %c0_i32_1 = arith.constant 0 : i32
    return %arg0, %arg1, %c0_i32, %c0_i32_0 : i32, i32, i32, i32
  }
  func.func @transform_1(%arg0: i32, %arg1: i32) -> (i32, i32) {
    %c0_i32 = arith.constant 0 : i32
    %c0_i32_0 = arith.constant 0 : i32
    %c0_i32_1 = arith.constant 0 : i32
    return %c0_i32, %c0_i32_0 : i32, i32
  }
  func.func @transform_2(%arg0: i32, %arg1: i32) -> (i32, i32) {
    %c0_i32 = arith.constant 0 : i32
    %c0_i32_0 = arith.constant 0 : i32
    %c0_i32_1 = arith.constant 0 : i32
    return %c0_i32, %c0_i32_0 : i32, i32
  }
  func.func @transform_3(%arg0: i32, %arg1: i32) -> (i32, i32) {
    %c0_i32 = arith.constant 0 : i32
    %c0_i32_0 = arith.constant 0 : i32
    %c0_i32_1 = arith.constant 0 : i32
    return %c0_i32, %c0_i32_0 : i32, i32
  }
  func.func @transform_4(%arg0: i32, %arg1: i32) -> (i32, i32) {
    %c0_i32 = arith.constant 0 : i32
    %c0_i32_0 = arith.constant 0 : i32
    %c0_i32_1 = arith.constant 0 : i32
    return %c0_i32, %c0_i32_0 : i32, i32
  }
  func.func @transform_5(%arg0: i32, %arg1: i32) -> (i32, i32) {
    %c0_i32 = arith.constant 0 : i32
    %c0_i32_0 = arith.constant 0 : i32
    return %arg0, %c0_i32 : i32, i32
  }
}

</mosaic_0001>

<llo_original>
// kernel: tpu_custom_call.1
$region0: #{tpu_custom_call.1}
  #allocation0 [shape = 'u32[]', space=smem, size = 0x4, offset = 0x4, fixed_abs, tag = 'smem constant byte address 0x4 - core index']
  #allocation1 [shape = 'u32[144,128]{1,0:T(1,128)}', space=vmem, size = 0x12000, scoped, tag = 'internal scratch']
  #allocation2 [shape = 'f32[8,8,128]{2,1,0:T(8,128)}', space=vmem, size = 0x8000, scoped, tag = 'scratch operand']
  %s0 = inlined_call_operand.hbm [shape: f32[1,8,8,28], index: 0, kind: input, shape index: {}]
  %s1 = inlined_call_operand.hbm [shape: f32[28,128], index: 1, kind: input, shape index: {}]
  %s2 = inlined_call_operand.vmem [shape: f32[1,128], index: 2, kind: input, shape index: {}]
  %s3 = inlined_call_operand.hbm [shape: f32[128,128], index: 3, kind: input, shape index: {}]
  %s4 = inlined_call_operand.vmem [shape: f32[1,128], index: 4, kind: input, shape index: {}]
  %s5 = inlined_call_operand.hbm [shape: f32[8,128], index: 5, kind: output, shape index: {}]
  %s6 = sld [smem:[#allocation0]]
  $region46: #{tpu_custom_call.1} parent=0
    _
  %s8 = ssub.s32 1, %s6
  %s9 = scalar_select 0, %s8, %s6
  $region1: #{tpu_custom_call.1} parent=0
    #allocation3 [shape = 'u8[32768]{0}', space=vmem, size = 0x8000, scoped, tag = 'input window, operand 0, single buffered']
    #allocation4 [shape = 's32[1]{0}', space=sflag, size = 0x4, scoped, tag = 'scoped memory for tpu_custom_call.1']
    #allocation5 [shape = 's32[1]{0}', space=sflag, size = 0x4, scoped, tag = 'scoped memory for tpu_custom_call.1']
    #allocation6 [shape = 'u8[16384]{0}', space=vmem, size = 0x4000, scoped, tag = 'input window, operand 1, single buffered']
    #allocation7 [shape = 's32[1]{0}', space=sflag, size = 0x4, scoped, tag = 'scoped memory for tpu_custom_call.1']
    #allocation8 [shape = 'u8[65536]{0}', space=vmem, size = 0x10000, scoped, tag = 'input window, operand 3, single buffered']
    #allocation9 [shape = 'u8[4096]{0}', space=vmem, size = 0x1000, scoped, tag = 'output window, operand 0, single buffered']
    %10 = vsyncpa [#allocation4], 0
    %11 = vsyncpa [#allocation7], 0
    %12 = vsyncpa [#allocation5], 0
    // Predicated region
    $region2: #{tpu_custom_call.1} parent=1 // pred_check
      _
    $region3: #{tpu_custom_call.1} parent=1 // pred_check_branch
      %14 = sbr.rel (0) target = $region5
    $region4: #{tpu_custom_call.1} parent=1 // pred_region
      %s16 = ssub.s32 1024, 1024
      %17 = vsyncadd [#allocation4], %s16
      %s18 = sshll.u32 [#allocation3], 4
      %s19 = int_to_ptr.vmem [resolvable:$true] %s18
      %24 = dma.hbm_to_vmem [thread:$0]  %s0, 1024, %s19, [#allocation4], 128, 128, 8
    $region5: #{tpu_custom_call.1} parent=1 // pred_fallthru
      _
    // Predicated region
    $region6: #{tpu_custom_call.1} parent=1 // pred_check
      _
    $region7: #{tpu_custom_call.1} parent=1 // pred_check_branch
      %26 = sbr.rel (0) target = $region9
    $region8: #{tpu_custom_call.1} parent=1 // pred_region
      %s28 = ssub.s32 512, 512
      %29 = vsyncadd [#allocation7], %s28
      %s30 = sshll.u32 [#allocation6], 4
      %s31 = int_to_ptr.vmem [resolvable:$true] %s30
      %36 = dma.hbm_to_vmem [thread:$0]  %s1, 512, %s31, [#allocation7], 128, 128, 8
    $region9: #{tpu_custom_call.1} parent=1 // pred_fallthru
      _
    // Predicated region
    $region10: #{tpu_custom_call.1} parent=1 // pred_check
      _
    $region11: #{tpu_custom_call.1} parent=1 // pred_check_branch
      %38 = sbr.rel (0) target = $region13
    $region12: #{tpu_custom_call.1} parent=1 // pred_region
      _
    $region13: #{tpu_custom_call.1} parent=1 // pred_fallthru
      _
    // Predicated region
    $region14: #{tpu_custom_call.1} parent=1 // pred_check
      _
    $region15: #{tpu_custom_call.1} parent=1 // pred_check_branch
      %40 = sbr.rel (0) target = $region17
    $region16: #{tpu_custom_call.1} parent=1 // pred_region
      %s42 = ssub.s32 2048, 2048
      %43 = vsyncadd [#allocation7], %s42
      %s44 = sshll.u32 [#allocation8], 4
      %s45 = int_to_ptr.vmem [resolvable:$true] %s44
      %50 = dma.hbm_to_vmem [thread:$0]  %s3, 2048, %s45, [#allocation7], 128, 128, 8
    $region17: #{tpu_custom_call.1} parent=1 // pred_fallthru
      _
    // Predicated region
    $region18: #{tpu_custom_call.1} parent=1 // pred_check
      _
    $region19: #{tpu_custom_call.1} parent=1 // pred_check_branch
      %52 = sbr.rel (0) target = $region21
    $region20: #{tpu_custom_call.1} parent=1 // pred_region
      _
    $region21: #{tpu_custom_call.1} parent=1 // pred_fallthru
      _
    // Predicated region
    $region22: #{tpu_custom_call.1} parent=1 // pred_check
      _
    $region23: #{tpu_custom_call.1} parent=1 // pred_check_branch
      %54 = sbr.rel (0) target = $region25
    $region24: #{tpu_custom_call.1} parent=1 // pred_region
      %55 = dma.done [#allocation4], 1024
    $region25: #{tpu_custom_call.1} parent=1 // pred_fallthru
      _
    // Predicated region
    $region26: #{tpu_custom_call.1} parent=1 // pred_check
      _
    $region27: #{tpu_custom_call.1} parent=1 // pred_check_branch
      %57 = sbr.rel (0) target = $region29
    $region28: #{tpu_custom_call.1} parent=1 // pred_region
      %58 = dma.done [#allocation7], 512
    $region29: #{tpu_custom_call.1} parent=1 // pred_fallthru
      _
    // Predicated region
    $region30: #{tpu_custom_call.1} parent=1 // pred_check
      _
    $region31: #{tpu_custom_call.1} parent=1 // pred_check_branch
      %60 = sbr.rel (0) target = $region33
    $region32: #{tpu_custom_call.1} parent=1 // pred_region
      %61 = dma.done [#allocation7], 2048
    $region33: #{tpu_custom_call.1} parent=1 // pred_fallthru
      _
    %p62 = scmp.eq.s32.totalorder 0, 0
    // Predicated region
    $region34: #{tpu_custom_call.1} parent=1 // pred_check
      %p63 = pneg %p62
    $region35: #{tpu_custom_call.1} parent=1 // pred_check_branch
      %65 = sbr.rel (%p63) target = $region37
    $region36: #{tpu_custom_call.1} parent=1 // pred_region
      %66 = vst [vmem:[#allocation9] sm:$0xff] 0.0
    $region37: #{tpu_custom_call.1} parent=1 // pred_fallthru
      _
    %v67 = vld [vmem:[#allocation3] sm:$0xff]
    %v68 = vld [vmem:[#allocation3 + $0x8] sm:$0xff]
    %v69 = vld [vmem:[#allocation3 + $0x10] sm:$0xff]
    %v70 = vld [vmem:[#allocation3 + $0x18] sm:$0xff]
    %v71 = vld [vmem:[#allocation3 + $0x20] sm:$0xff]
    %v72 = vld [vmem:[#allocation3 + $0x28] sm:$0xff]
    %v73 = vld [vmem:[#allocation3 + $0x30] sm:$0xff]
    %v74 = vld [vmem:[#allocation3 + $0x38] sm:$0xff]
    %v75 = vld [vmem:[#allocation6] sm:$0xff]
    %v76 = vld [vmem:[#allocation6 + $0x8] sm:$0xff]
    %v77 = vld [vmem:[#allocation6 + $0x10] sm:$0xff]
    %v78 = vld [vmem:[#allocation6 + $0x18] sm:$0xf]
    %v79 = vld [vmem:[%s2] sm:$0x1]
    %v81 = vlaneseq
    %v82 = vshrl.u32 %v81, 7
    %v83 = vsub.s32 0, %v82
    %v84 = vrot.slane %v79, %v83
    %vm86 = vcmask 228352
    %v88 = vsel %vm86, %v67, 0
    %v91 = vsel %vm86, %v68, 0
    %v94 = vsel %vm86, %v69, 0
    %v97 = vsel %vm86, %v70, 0
    %v100 = vsel %vm86, %v71, 0
    %v103 = vsel %vm86, %v72, 0
    %v106 = vsel %vm86, %v73, 0
    %v109 = vsel %vm86, %v74, 0
    %vm111 = vcmask 1043456
    %v113 = vsel %vm111, %v78, 0
    %115 = vmatprep.subr.mxu0 0.0
    %116 = vmatpush1.msra.mxu0 0.0
    %117 = vmatprep.subr.mxu0 0.0
    %118 = vmatpush1.msra.mxu0 0.0
    %119 = vmatprep.subr.mxu0 0.0
    %120 = vmatpush1.msra.mxu0 0.0
    %121 = vmatprep.subr.mxu0 0.0
    %122 = vmatpush1.msra.mxu0 0.0
    %123 = vmatprep.subr.mxu0 0.0
    %124 = vmatpush1.msra.mxu0 0.0
    %125 = vmatprep.subr.mxu0 0.0
    %126 = vmatpush1.msra.mxu0 0.0
    %127 = vmatprep.subr.mxu0 0.0
    %128 = vmatpush1.msra.mxu0 0.0
    %129 = vmatprep.subr.mxu0 0.0
    %130 = vmatpush1.msra.mxu0 0.0
    %131 = vmatprep.subr.mxu0 0.0
    %132 = vmatpush1.msra.mxu0 0.0
    %133 = vmatprep.subr.mxu0 0.0
    %134 = vmatpush1.msra.mxu0 0.0
    %135 = vmatprep.subr.mxu0 0.0
    %136 = vmatpush1.msra.mxu0 0.0
    %137 = vmatprep.subr.mxu0 0.0
    %138 = vmatpush1.msra.mxu0 0.0
    %139 = vmatprep.subr.mxu0 0.0
    %140 = vmatpush1.msra.mxu0 %v113
    %141 = vmatprep.subr.mxu0 0.0
    %142 = vmatpush1.msra.mxu0 %v77
    %143 = vmatprep.subr.mxu0 0.0
    %144 = vmatpush1.msra.mxu0 %v76
    %145 = vmatprep.subr.mxu0 0.0
    %146 = vmatpush1.msra.mxu0 %v75
    %147 = vmatprep.subr.mxu0 0.0
    %148 = vmatpush2.msra.mxu0 0.0
    %149 = vmatprep.subr.mxu0 0.0
    %150 = vmatpush2.msra.mxu0 0.0
    %151 = vmatprep.subr.mxu0 0.0
    %152 = vmatpush2.msra.mxu0 0.0
    %153 = vmatprep.subr.mxu0 0.0
    %154 = vmatpush2.msra.mxu0 0.0
    %155 = vmatprep.subr.mxu0 0.0
    %156 = vmatpush2.msra.mxu0 0.0
    %157 = vmatprep.subr.mxu0 0.0
    %158 = vmatpush2.msra.mxu0 0.0
    %159 = vmatprep.subr.mxu0 0.0
    %160 = vmatpush2.msra.mxu0 0.0
    %161 = vmatprep.subr.mxu0 0.0
    %162 = vmatpush2.msra.mxu0 0.0
    %163 = vmatprep.subr.mxu0 0.0
    %164 = vmatpush2.msra.mxu0 0.0
    %165 = vmatprep.subr.mxu0 0.0
    %166 = vmatpush2.msra.mxu0 0.0
    %167 = vmatprep.subr.mxu0 0.0
    %168 = vmatpush2.msra.mxu0 0.0
    %169 = vmatprep.subr.mxu0 0.0
    %170 = vmatpush2.msra.mxu0 0.0
    %171 = vmatprep.subr.mxu0 0.0
    %172 = vmatpush2.msra.mxu0 0.0
    %173 = vmatprep.subr.mxu0 0.0
    %174 = vmatpush2.msra.mxu0 0.0
    %175 = vmatprep.subr.mxu0 0.0
    %176 = vmatpush2.msra.mxu0 0.0
    %177 = vmatprep.subr.mxu0 0.0
    %178 = vmatpush2.msra.mxu0 0.0
    %179 = vmatprep.mubr.f32.mxu0 0.0
    %180 = vmatmul.mubr.f32.gmra.mxu0 %v88
    %v181 = vpop.f32.mrf.mxu0
    %v182 = vadd.f32 %v84, %v181
    %v183 = vpop.f32.mrf.mxu0
    %184 = vmatprep.mubr.f32.mxu0 0.0
    %185 = vmatmul.mubr.f32.gmra.mxu0 %v91
    %v186 = vpop.f32.mrf.mxu0
    %v187 = vadd.f32 %v84, %v186
    %v188 = vpop.f32.mrf.mxu0
    %189 = vmatprep.mubr.f32.mxu0 0.0
    %190 = vmatmul.mubr.f32.gmra.mxu0 %v94
    %v191 = vpop.f32.mrf.mxu0
    %v192 = vadd.f32 %v84, %v191
    %v193 = vpop.f32.mrf.mxu0
    %194 = vmatprep.mubr.f32.mxu0 0.0
    %195 = vmatmul.mubr.f32.gmra.mxu0 %v97
    %v196 = vpop.f32.mrf.mxu0
    %v197 = vadd.f32 %v84, %v196
    %v198 = vpop.f32.mrf.mxu0
    %199 = vmatprep.mubr.f32.mxu0 0.0
    %200 = vmatmul.mubr.f32.gmra.mxu0 %v100
    %v201 = vpop.f32.mrf.mxu0
    %v202 = vadd.f32 %v84, %v201
    %v203 = vpop.f32.mrf.mxu0
    %204 = vmatprep.mubr.f32.mxu0 0.0
    %205 = vmatmul.mubr.f32.gmra.mxu0 %v103
    %v206 = vpop.f32.mrf.mxu0
    %v207 = vadd.f32 %v84, %v206
    %v208 = vpop.f32.mrf.mxu0
    %209 = vmatprep.mubr.f32.mxu0 0.0
    %210 = vmatmul.mubr.f32.gmra.mxu0 %v106
    %v211 = vpop.f32.mrf.mxu0
    %v212 = vadd.f32 %v84, %v211
    %v213 = vpop.f32.mrf.mxu0
    %214 = vmatprep.mubr.f32.mxu0 0.0
    %215 = vmatmul.mubr.f32.gmra.mxu0 %v109
    %v216 = vpop.f32.mrf.mxu0
    %v217 = vadd.f32 %v84, %v216
    %v218 = vpop.f32.mrf.mxu0
    %219 = vdwg.mxu0
    %220 = vst [vmem:[#allocation2] sm:$0xff] %v182
    %221 = vst [vmem:[#allocation2 + $0x8] sm:$0xff] %v187
    %222 = vst [vmem:[#allocation2 + $0x10] sm:$0xff] %v192
    %223 = vst [vmem:[#allocation2 + $0x18] sm:$0xff] %v197
    %224 = vst [vmem:[#allocation2 + $0x20] sm:$0xff] %v202
    %225 = vst [vmem:[#allocation2 + $0x28] sm:$0xff] %v207
    %226 = vst [vmem:[#allocation2 + $0x30] sm:$0xff] %v212
    %227 = vst [vmem:[#allocation2 + $0x38] sm:$0xff] %v217
    %v228 = vld [vmem:[%s4] sm:$0x1]
    %v229 = vld [vmem:[#allocation9] sm:$0xff]
    %v230 = vld [vmem:[#allocation8] sm:$0xff]
    %v231 = vld [vmem:[#allocation8 + $0x8] sm:$0xff]
    %v232 = vld [vmem:[#allocation8 + $0x10] sm:$0xff]
    %v233 = vld [vmem:[#allocation8 + $0x18] sm:$0xff]
    %v234 = vld [vmem:[#allocation8 + $0x20] sm:$0xff]
    %v235 = vld [vmem:[#allocation8 + $0x28] sm:$0xff]
    %v236 = vld [vmem:[#allocation8 + $0x30] sm:$0xff]
    %v237 = vld [vmem:[#allocation8 + $0x38] sm:$0xff]
    %v238 = vld [vmem:[#allocation8 + $0x40] sm:$0xff]
    %v239 = vld [vmem:[#allocation8 + $0x48] sm:$0xff]
    %v240 = vld [vmem:[#allocation8 + $0x50] sm:$0xff]
    %v241 = vld [vmem:[#allocation8 + $0x58] sm:$0xff]
    %v242 = vld [vmem:[#allocation8 + $0x60] sm:$0xff]
    %v243 = vld [vmem:[#allocation8 + $0x68] sm:$0xff]
    %v244 = vld [vmem:[#allocation8 + $0x70] sm:$0xff]
    %v245 = vld [vmem:[#allocation8 + $0x78] sm:$0xff]
    %v246 = vld [vmem:[#allocation2] sm:$0xff]
    %247 = vmatprep.subr.mxu0 0.0
    %248 = vmatpush1.msra.mxu0 %v245
    %249 = vmatprep.subr.mxu0 0.0
    %250 = vmatpush1.msra.mxu0 %v244
    %251 = vmatprep.subr.mxu0 0.0
    %252 = vmatpush1.msra.mxu0 %v243
    %253 = vmatprep.subr.mxu0 0.0
    %254 = vmatpush1.msra.mxu0 %v242
    %255 = vmatprep.subr.mxu0 0.0
    %256 = vmatpush1.msra.mxu0 %v241
    %257 = vmatprep.subr.mxu0 0.0
    %258 = vmatpush1.msra.mxu0 %v240
    %259 = vmatprep.subr.mxu0 0.0
    %260 = vmatpush1.msra.mxu0 %v239
    %261 = vmatprep.subr.mxu0 0.0
    %262 = vmatpush1.msra.mxu0 %v238
    %263 = vmatprep.subr.mxu0 0.0
    %264 = vmatpush1.msra.mxu0 %v237
    %265 = vmatprep.subr.mxu0 0.0
    %266 = vmatpush1.msra.mxu0 %v236
    %267 = vmatprep.subr.mxu0 0.0
    %268 = vmatpush1.msra.mxu0 %v235
    %269 = vmatprep.subr.mxu0 0.0
    %270 = vmatpush1.msra.mxu0 %v234
    %271 = vmatprep.subr.mxu0 0.0
    %272 = vmatpush1.msra.mxu0 %v233
    %273 = vmatprep.subr.mxu0 0.0
    %274 = vmatpush1.msra.mxu0 %v232
    %275 = vmatprep.subr.mxu0 0.0
    %276 = vmatpush1.msra.mxu0 %v231
    %277 = vmatprep.subr.mxu0 0.0
    %278 = vmatpush1.msra.mxu0 %v230
    %279 = vmatprep.subr.mxu0 0.0
    %280 = vmatpush2.msra.mxu0 0.0
    %281 = vmatprep.subr.mxu0 0.0
    %282 = vmatpush2.msra.mxu0 0.0
    %283 = vmatprep.subr.mxu0 0.0
    %284 = vmatpush2.msra.mxu0 0.0
    %285 = vmatprep.subr.mxu0 0.0
    %286 = vmatpush2.msra.mxu0 0.0
    %287 = vmatprep.subr.mxu0 0.0
    %288 = vmatpush2.msra.mxu0 0.0
    %289 = vmatprep.subr.mxu0 0.0
    %290 = vmatpush2.msra.mxu0 0.0
    %291 = vmatprep.subr.mxu0 0.0
    %292 = vmatpush2.msra.mxu0 0.0
    %293 = vmatprep.subr.mxu0 0.0
    %294 = vmatpush2.msra.mxu0 0.0
    %295 = vmatprep.subr.mxu0 0.0
    %296 = vmatpush2.msra.mxu0 0.0
    %297 = vmatprep.subr.mxu0 0.0
    %298 = vmatpush2.msra.mxu0 0.0
    %299 = vmatprep.subr.mxu0 0.0
    %300 = vmatpush2.msra.mxu0 0.0
    %301 = vmatprep.subr.mxu0 0.0
    %302 = vmatpush2.msra.mxu0 0.0
    %303 = vmatprep.subr.mxu0 0.0
    %304 = vmatpush2.msra.mxu0 0.0
    %305 = vmatprep.subr.mxu0 0.0
    %306 = vmatpush2.msra.mxu0 0.0
    %307 = vmatprep.subr.mxu0 0.0
    %308 = vmatpush2.msra.mxu0 0.0
    %309 = vmatprep.subr.mxu0 0.0
    %310 = vmatpush2.msra.mxu0 0.0
    %311 = vmatprep.mubr.f32.mxu0 0.0
    %312 = vmatmul.mubr.f32.gmra.mxu0 %v229
    %v313 = vpop.f32.mrf.mxu0
    %v314 = vadd.f32 %v246, %v313
    %v315 = vpop.f32.mrf.mxu0
    %316 = vdwg.mxu0
    %v317 = vtanh.pop %v314
    %v318 = vsub.f32 %v317, %v229
    %v320 = vlaneseq
    %v321 = vshrl.u32 %v320, 7
    %v322 = vsub.s32 0, %v321
    %v323 = vrot.slane %v228, %v322
    %v325 = vmul.f32 %v323, %v318
    %v326 = vadd.f32 %v229, %v325
    %s327 = scalar_lea.vmem [#allocation2], 8
    %v328 = vld [vmem:[%s327] sm:$0xff]
    %329 = vmatprep.subr.mxu0 0.0
    %330 = vmatpush1.msra.mxu0 %v245
    %331 = vmatprep.subr.mxu0 0.0
    %332 = vmatpush1.msra.mxu0 %v244
    %333 = vmatprep.subr.mxu0 0.0
    %334 = vmatpush1.msra.mxu0 %v243
    %335 = vmatprep.subr.mxu0 0.0
    %336 = vmatpush1.msra.mxu0 %v242
    %337 = vmatprep.subr.mxu0 0.0
    %338 = vmatpush1.msra.mxu0 %v241
    %339 = vmatprep.subr.mxu0 0.0
    %340 = vmatpush1.msra.mxu0 %v240
    %341 = vmatprep.subr.mxu0 0.0
    %342 = vmatpush1.msra.mxu0 %v239
    %343 = vmatprep.subr.mxu0 0.0
    %344 = vmatpush1.msra.mxu0 %v238
    %345 = vmatprep.subr.mxu0 0.0
    %346 = vmatpush1.msra.mxu0 %v237
    %347 = vmatprep.subr.mxu0 0.0
    %348 = vmatpush1.msra.mxu0 %v236
    %349 = vmatprep.subr.mxu0 0.0
    %350 = vmatpush1.msra.mxu0 %v235
    %351 = vmatprep.subr.mxu0 0.0
    %352 = vmatpush1.msra.mxu0 %v234
    %353 = vmatprep.subr.mxu0 0.0
    %354 = vmatpush1.msra.mxu0 %v233
    %355 = vmatprep.subr.mxu0 0.0
    %356 = vmatpush1.msra.mxu0 %v232
    %357 = vmatprep.subr.mxu0 0.0
    %358 = vmatpush1.msra.mxu0 %v231
    %359 = vmatprep.subr.mxu0 0.0
    %360 = vmatpush1.msra.mxu0 %v230
    %361 = vmatprep.subr.mxu0 0.0
    %362 = vmatpush2.msra.mxu0 0.0
    %363 = vmatprep.subr.mxu0 0.0
    %364 = vmatpush2.msra.mxu0 0.0
    %365 = vmatprep.subr.mxu0 0.0
    %366 = vmatpush2.msra.mxu0 0.0
    %367 = vmatprep.subr.mxu0 0.0
    %368 = vmatpush2.msra.mxu0 0.0
    %369 = vmatprep.subr.mxu0 0.0
    %370 = vmatpush2.msra.mxu0 0.0
    %371 = vmatprep.subr.mxu0 0.0
    %372 = vmatpush2.msra.mxu0 0.0
    %373 = vmatprep.subr.mxu0 0.0
    %374 = vmatpush2.msra.mxu0 0.0
    %375 = vmatprep.subr.mxu0 0.0
    %376 = vmatpush2.msra.mxu0 0.0
    %377 = vmatprep.subr.mxu0 0.0
    %378 = vmatpush2.msra.mxu0 0.0
    %379 = vmatprep.subr.mxu0 0.0
    %380 = vmatpush2.msra.mxu0 0.0
    %381 = vmatprep.subr.mxu0 0.0
    %382 = vmatpush2.msra.mxu0 0.0
    %383 = vmatprep.subr.mxu0 0.0
    %384 = vmatpush2.msra.mxu0 0.0
    %385 = vmatprep.subr.mxu0 0.0
    %386 = vmatpush2.msra.mxu0 0.0
    %387 = vmatprep.subr.mxu0 0.0
    %388 = vmatpush2.msra.mxu0 0.0
    %389 = vmatprep.subr.mxu0 0.0
    %390 = vmatpush2.msra.mxu0 0.0
    %391 = vmatprep.subr.mxu0 0.0
    %392 = vmatpush2.msra.mxu0 0.0
    %393 = vmatprep.mubr.f32.mxu0 0.0
    %394 = vmatmul.mubr.f32.gmra.mxu0 %v326
    %v395 = vpop.f32.mrf.mxu0
    %v396 = vadd.f32 %v328, %v395
    %v397 = vpop.f32.mrf.mxu0
    %398 = vdwg.mxu0
    %v399 = vtanh.pop %v396
    %v400 = vsub.f32 %v399, %v326
    %v401 = vmul.f32 %v323, %v400
    %v402 = vadd.f32 %v326, %v401
    %s403 = scalar_lea.vmem [#allocation2], 16
    %v404 = vld [vmem:[%s403] sm:$0xff]
    %405 = vmatprep.subr.mxu0 0.0
    %406 = vmatpush1.msra.mxu0 %v245
    %407 = vmatprep.subr.mxu0 0.0
    %408 = vmatpush1.msra.mxu0 %v244
    %409 = vmatprep.subr.mxu0 0.0
    %410 = vmatpush1.msra.mxu0 %v243
    %411 = vmatprep.subr.mxu0 0.0
    %412 = vmatpush1.msra.mxu0 %v242
    %413 = vmatprep.subr.mxu0 0.0
    %414 = vmatpush1.msra.mxu0 %v241
    %415 = vmatprep.subr.mxu0 0.0
    %416 = vmatpush1.msra.mxu0 %v240
    %417 = vmatprep.subr.mxu0 0.0
    %418 = vmatpush1.msra.mxu0 %v239
    %419 = vmatprep.subr.mxu0 0.0
    %420 = vmatpush1.msra.mxu0 %v238
    %421 = vmatprep.subr.mxu0 0.0
    %422 = vmatpush1.msra.mxu0 %v237
    %423 = vmatprep.subr.mxu0 0.0
    %424 = vmatpush1.msra.mxu0 %v236
    %425 = vmatprep.subr.mxu0 0.0
    %426 = vmatpush1.msra.mxu0 %v235
    %427 = vmatprep.subr.mxu0 0.0
    %428 = vmatpush1.msra.mxu0 %v234
    %429 = vmatprep.subr.mxu0 0.0
    %430 = vmatpush1.msra.mxu0 %v233
    %431 = vmatprep.subr.mxu0 0.0
    %432 = vmatpush1.msra.mxu0 %v232
    %433 = vmatprep.subr.mxu0 0.0
    %434 = vmatpush1.msra.mxu0 %v231
    %435 = vmatprep.subr.mxu0 0.0
    %436 = vmatpush1.msra.mxu0 %v230
    %437 = vmatprep.subr.mxu0 0.0
    %438 = vmatpush2.msra.mxu0 0.0
    %439 = vmatprep.subr.mxu0 0.0
    %440 = vmatpush2.msra.mxu0 0.0
    %441 = vmatprep.subr.mxu0 0.0
    %442 = vmatpush2.msra.mxu0 0.0
    %443 = vmatprep.subr.mxu0 0.0
    %444 = vmatpush2.msra.mxu0 0.0
    %445 = vmatprep.subr.mxu0 0.0
    %446 = vmatpush2.msra.mxu0 0.0
    %447 = vmatprep.subr.mxu0 0.0
    %448 = vmatpush2.msra.mxu0 0.0
    %449 = vmatprep.subr.mxu0 0.0
    %450 = vmatpush2.msra.mxu0 0.0
    %451 = vmatprep.subr.mxu0 0.0
    %452 = vmatpush2.msra.mxu0 0.0
    %453 = vmatprep.subr.mxu0 0.0
    %454 = vmatpush2.msra.mxu0 0.0
    %455 = vmatprep.subr.mxu0 0.0
    %456 = vmatpush2.msra.mxu0 0.0
    %457 = vmatprep.subr.mxu0 0.0
    %458 = vmatpush2.msra.mxu0 0.0
    %459 = vmatprep.subr.mxu0 0.0
    %460 = vmatpush2.msra.mxu0 0.0
    %461 = vmatprep.subr.mxu0 0.0
    %462 = vmatpush2.msra.mxu0 0.0
    %463 = vmatprep.subr.mxu0 0.0
    %464 = vmatpush2.msra.mxu0 0.0
    %465 = vmatprep.subr.mxu0 0.0
    %466 = vmatpush2.msra.mxu0 0.0
    %467 = vmatprep.subr.mxu0 0.0
    %468 = vmatpush2.msra.mxu0 0.0
    %469 = vmatprep.mubr.f32.mxu0 0.0
    %470 = vmatmul.mubr.f32.gmra.mxu0 %v402
    %v471 = vpop.f32.mrf.mxu0
    %v472 = vadd.f32 %v404, %v471
    %v473 = vpop.f32.mrf.mxu0
    %474 = vdwg.mxu0
    %v475 = vtanh.pop %v472
    %v476 = vsub.f32 %v475, %v402
    %v477 = vmul.f32 %v323, %v476
    %v478 = vadd.f32 %v402, %v477
    %s479 = scalar_lea.vmem [#allocation2], 24
    %v480 = vld [vmem:[%s479] sm:$0xff]
    %481 = vmatprep.subr.mxu0 0.0
    %482 = vmatpush1.msra.mxu0 %v245
    %483 = vmatprep.subr.mxu0 0.0
    %484 = vmatpush1.msra.mxu0 %v244
    %485 = vmatprep.subr.mxu0 0.0
    %486 = vmatpush1.msra.mxu0 %v243
    %487 = vmatprep.subr.mxu0 0.0
    %488 = vmatpush1.msra.mxu0 %v242
    %489 = vmatprep.subr.mxu0 0.0
    %490 = vmatpush1.msra.mxu0 %v241
    %491 = vmatprep.subr.mxu0 0.0
    %492 = vmatpush1.msra.mxu0 %v240
    %493 = vmatprep.subr.mxu0 0.0
    %494 = vmatpush1.msra.mxu0 %v239
    %495 = vmatprep.subr.mxu0 0.0
    %496 = vmatpush1.msra.mxu0 %v238
    %497 = vmatprep.subr.mxu0 0.0
    %498 = vmatpush1.msra.mxu0 %v237
    %499 = vmatprep.subr.mxu0 0.0
    %500 = vmatpush1.msra.mxu0 %v236
    %501 = vmatprep.subr.mxu0 0.0
    %502 = vmatpush1.msra.mxu0 %v235
    %503 = vmatprep.subr.mxu0 0.0
    %504 = vmatpush1.msra.mxu0 %v234
    %505 = vmatprep.subr.mxu0 0.0
    %506 = vmatpush1.msra.mxu0 %v233
    %507 = vmatprep.subr.mxu0 0.0
    %508 = vmatpush1.msra.mxu0 %v232
    %509 = vmatprep.subr.mxu0 0.0
    %510 = vmatpush1.msra.mxu0 %v231
    %511 = vmatprep.subr.mxu0 0.0
    %512 = vmatpush1.msra.mxu0 %v230
    %513 = vmatprep.subr.mxu0 0.0
    %514 = vmatpush2.msra.mxu0 0.0
    %515 = vmatprep.subr.mxu0 0.0
    %516 = vmatpush2.msra.mxu0 0.0
    %517 = vmatprep.subr.mxu0 0.0
    %518 = vmatpush2.msra.mxu0 0.0
    %519 = vmatprep.subr.mxu0 0.0
    %520 = vmatpush2.msra.mxu0 0.0
    %521 = vmatprep.subr.mxu0 0.0
    %522 = vmatpush2.msra.mxu0 0.0
    %523 = vmatprep.subr.mxu0 0.0
    %524 = vmatpush2.msra.mxu0 0.0
    %525 = vmatprep.subr.mxu0 0.0
    %526 = vmatpush2.msra.mxu0 0.0
    %527 = vmatprep.subr.mxu0 0.0
    %528 = vmatpush2.msra.mxu0 0.0
    %529 = vmatprep.subr.mxu0 0.0
    %530 = vmatpush2.msra.mxu0 0.0
    %531 = vmatprep.subr.mxu0 0.0
    %532 = vmatpush2.msra.mxu0 0.0
    %533 = vmatprep.subr.mxu0 0.0
    %534 = vmatpush2.msra.mxu0 0.0
    %535 = vmatprep.subr.mxu0 0.0
    %536 = vmatpush2.msra.mxu0 0.0
    %537 = vmatprep.subr.mxu0 0.0
    %538 = vmatpush2.msra.mxu0 0.0
    %539 = vmatprep.subr.mxu0 0.0
    %540 = vmatpush2.msra.mxu0 0.0
    %541 = vmatprep.subr.mxu0 0.0
    %542 = vmatpush2.msra.mxu0 0.0
    %543 = vmatprep.subr.mxu0 0.0
    %544 = vmatpush2.msra.mxu0 0.0
    %545 = vmatprep.mubr.f32.mxu0 0.0
    %546 = vmatmul.mubr.f32.gmra.mxu0 %v478
    %v547 = vpop.f32.mrf.mxu0
    %v548 = vadd.f32 %v480, %v547
    %v549 = vpop.f32.mrf.mxu0
    %550 = vdwg.mxu0
    %v551 = vtanh.pop %v548
    %v552 = vsub.f32 %v551, %v478
    %v553 = vmul.f32 %v323, %v552
    %v554 = vadd.f32 %v478, %v553
    %s555 = scalar_lea.vmem [#allocation2], 32
    %v556 = vld [vmem:[%s555] sm:$0xff]
    %557 = vmatprep.subr.mxu0 0.0
    %558 = vmatpush1.msra.mxu0 %v245
    %559 = vmatprep.subr.mxu0 0.0
    %560 = vmatpush1.msra.mxu0 %v244
    %561 = vmatprep.subr.mxu0 0.0
    %562 = vmatpush1.msra.mxu0 %v243
    %563 = vmatprep.subr.mxu0 0.0
    %564 = vmatpush1.msra.mxu0 %v242
    %565 = vmatprep.subr.mxu0 0.0
    %566 = vmatpush1.msra.mxu0 %v241
    %567 = vmatprep.subr.mxu0 0.0
    %568 = vmatpush1.msra.mxu0 %v240
    %569 = vmatprep.subr.mxu0 0.0
    %570 = vmatpush1.msra.mxu0 %v239
    %571 = vmatprep.subr.mxu0 0.0
    %572 = vmatpush1.msra.mxu0 %v238
    %573 = vmatprep.subr.mxu0 0.0
    %574 = vmatpush1.msra.mxu0 %v237
    %575 = vmatprep.subr.mxu0 0.0
    %576 = vmatpush1.msra.mxu0 %v236
    %577 = vmatprep.subr.mxu0 0.0
    %578 = vmatpush1.msra.mxu0 %v235
    %579 = vmatprep.subr.mxu0 0.0
    %580 = vmatpush1.msra.mxu0 %v234
    %581 = vmatprep.subr.mxu0 0.0
    %582 = vmatpush1.msra.mxu0 %v233
    %583 = vmatprep.subr.mxu0 0.0
    %584 = vmatpush1.msra.mxu0 %v232
    %585 = vmatprep.subr.mxu0 0.0
    %586 = vmatpush1.msra.mxu0 %v231
    %587 = vmatprep.subr.mxu0 0.0
    %588 = vmatpush1.msra.mxu0 %v230
    %589 = vmatprep.subr.mxu0 0.0
    %590 = vmatpush2.msra.mxu0 0.0
    %591 = vmatprep.subr.mxu0 0.0
    %592 = vmatpush2.msra.mxu0 0.0
    %593 = vmatprep.subr.mxu0 0.0
    %594 = vmatpush2.msra.mxu0 0.0
    %595 = vmatprep.subr.mxu0 0.0
    %596 = vmatpush2.msra.mxu0 0.0
    %597 = vmatprep.subr.mxu0 0.0
    %598 = vmatpush2.msra.mxu0 0.0
    %599 = vmatprep.subr.mxu0 0.0
    %600 = vmatpush2.msra.mxu0 0.0
    %601 = vmatprep.subr.mxu0 0.0
    %602 = vmatpush2.msra.mxu0 0.0
    %603 = vmatprep.subr.mxu0 0.0
    %604 = vmatpush2.msra.mxu0 0.0
    %605 = vmatprep.subr.mxu0 0.0
    %606 = vmatpush2.msra.mxu0 0.0
    %607 = vmatprep.subr.mxu0 0.0
    %608 = vmatpush2.msra.mxu0 0.0
    %609 = vmatprep.subr.mxu0 0.0
    %610 = vmatpush2.msra.mxu0 0.0
    %611 = vmatprep.subr.mxu0 0.0
    %612 = vmatpush2.msra.mxu0 0.0
    %613 = vmatprep.subr.mxu0 0.0
    %614 = vmatpush2.msra.mxu0 0.0
    %615 = vmatprep.subr.mxu0 0.0
    %616 = vmatpush2.msra.mxu0 0.0
    %617 = vmatprep.subr.mxu0 0.0
    %618 = vmatpush2.msra.mxu0 0.0
    %619 = vmatprep.subr.mxu0 0.0
    %620 = vmatpush2.msra.mxu0 0.0
    %621 = vmatprep.mubr.f32.mxu0 0.0
    %622 = vmatmul.mubr.f32.gmra.mxu0 %v554
    %v623 = vpop.f32.mrf.mxu0
    %v624 = vadd.f32 %v556, %v623
    %v625 = vpop.f32.mrf.mxu0
    %626 = vdwg.mxu0
    %v627 = vtanh.pop %v624
    %v628 = vsub.f32 %v627, %v554
    %v629 = vmul.f32 %v323, %v628
    %v630 = vadd.f32 %v554, %v629
    %s631 = scalar_lea.vmem [#allocation2], 40
    %v632 = vld [vmem:[%s631] sm:$0xff]
    %633 = vmatprep.subr.mxu0 0.0
    %634 = vmatpush1.msra.mxu0 %v245
    %635 = vmatprep.subr.mxu0 0.0
    %636 = vmatpush1.msra.mxu0 %v244
    %637 = vmatprep.subr.mxu0 0.0
    %638 = vmatpush1.msra.mxu0 %v243
    %639 = vmatprep.subr.mxu0 0.0
    %640 = vmatpush1.msra.mxu0 %v242
    %641 = vmatprep.subr.mxu0 0.0
    %642 = vmatpush1.msra.mxu0 %v241
    %643 = vmatprep.subr.mxu0 0.0
    %644 = vmatpush1.msra.mxu0 %v240
    %645 = vmatprep.subr.mxu0 0.0
    %646 = vmatpush1.msra.mxu0 %v239
    %647 = vmatprep.subr.mxu0 0.0
    %648 = vmatpush1.msra.mxu0 %v238
    %649 = vmatprep.subr.mxu0 0.0
    %650 = vmatpush1.msra.mxu0 %v237
    %651 = vmatprep.subr.mxu0 0.0
    %652 = vmatpush1.msra.mxu0 %v236
    %653 = vmatprep.subr.mxu0 0.0
    %654 = vmatpush1.msra.mxu0 %v235
    %655 = vmatprep.subr.mxu0 0.0
    %656 = vmatpush1.msra.mxu0 %v234
    %657 = vmatprep.subr.mxu0 0.0
    %658 = vmatpush1.msra.mxu0 %v233
    %659 = vmatprep.subr.mxu0 0.0
    %660 = vmatpush1.msra.mxu0 %v232
    %661 = vmatprep.subr.mxu0 0.0
    %662 = vmatpush1.msra.mxu0 %v231
    %663 = vmatprep.subr.mxu0 0.0
    %664 = vmatpush1.msra.mxu0 %v230
    %665 = vmatprep.subr.mxu0 0.0
    %666 = vmatpush2.msra.mxu0 0.0
    %667 = vmatprep.subr.mxu0 0.0
    %668 = vmatpush2.msra.mxu0 0.0
    %669 = vmatprep.subr.mxu0 0.0
    %670 = vmatpush2.msra.mxu0 0.0
    %671 = vmatprep.subr.mxu0 0.0
    %672 = vmatpush2.msra.mxu0 0.0
    %673 = vmatprep.subr.mxu0 0.0
    %674 = vmatpush2.msra.mxu0 0.0
    %675 = vmatprep.subr.mxu0 0.0
    %676 = vmatpush2.msra.mxu0 0.0
    %677 = vmatprep.subr.mxu0 0.0
    %678 = vmatpush2.msra.mxu0 0.0
    %679 = vmatprep.subr.mxu0 0.0
    %680 = vmatpush2.msra.mxu0 0.0
    %681 = vmatprep.subr.mxu0 0.0
    %682 = vmatpush2.msra.mxu0 0.0
    %683 = vmatprep.subr.mxu0 0.0
    %684 = vmatpush2.msra.mxu0 0.0
    %685 = vmatprep.subr.mxu0 0.0
    %686 = vmatpush2.msra.mxu0 0.0
    %687 = vmatprep.subr.mxu0 0.0
    %688 = vmatpush2.msra.mxu0 0.0
    %689 = vmatprep.subr.mxu0 0.0
    %690 = vmatpush2.msra.mxu0 0.0
    %691 = vmatprep.subr.mxu0 0.0
    %692 = vmatpush2.msra.mxu0 0.0
    %693 = vmatprep.subr.mxu0 0.0
    %694 = vmatpush2.msra.mxu0 0.0
    %695 = vmatprep.subr.mxu0 0.0
    %696 = vmatpush2.msra.mxu0 0.0
    %697 = vmatprep.mubr.f32.mxu0 0.0
    %698 = vmatmul.mubr.f32.gmra.mxu0 %v630
    %v699 = vpop.f32.mrf.mxu0
    %v700 = vadd.f32 %v632, %v699
    %v701 = vpop.f32.mrf.mxu0
    %702 = vdwg.mxu0
    %v703 = vtanh.pop %v700
    %v704 = vsub.f32 %v703, %v630
    %v705 = vmul.f32 %v323, %v704
    %v706 = vadd.f32 %v630, %v705
    %s707 = scalar_lea.vmem [#allocation2], 48
    %v708 = vld [vmem:[%s707] sm:$0xff]
    %709 = vmatprep.subr.mxu0 0.0
    %710 = vmatpush1.msra.mxu0 %v245
    %711 = vmatprep.subr.mxu0 0.0
    %712 = vmatpush1.msra.mxu0 %v244
    %713 = vmatprep.subr.mxu0 0.0
    %714 = vmatpush1.msra.mxu0 %v243
    %715 = vmatprep.subr.mxu0 0.0
    %716 = vmatpush1.msra.mxu0 %v242
    %717 = vmatprep.subr.mxu0 0.0
    %718 = vmatpush1.msra.mxu0 %v241
    %719 = vmatprep.subr.mxu0 0.0
    %720 = vmatpush1.msra.mxu0 %v240
    %721 = vmatprep.subr.mxu0 0.0
    %722 = vmatpush1.msra.mxu0 %v239
    %723 = vmatprep.subr.mxu0 0.0
    %724 = vmatpush1.msra.mxu0 %v238
    %725 = vmatprep.subr.mxu0 0.0
    %726 = vmatpush1.msra.mxu0 %v237
    %727 = vmatprep.subr.mxu0 0.0
    %728 = vmatpush1.msra.mxu0 %v236
    %729 = vmatprep.subr.mxu0 0.0
    %730 = vmatpush1.msra.mxu0 %v235
    %731 = vmatprep.subr.mxu0 0.0
    %732 = vmatpush1.msra.mxu0 %v234
    %733 = vmatprep.subr.mxu0 0.0
    %734 = vmatpush1.msra.mxu0 %v233
    %735 = vmatprep.subr.mxu0 0.0
    %736 = vmatpush1.msra.mxu0 %v232
    %737 = vmatprep.subr.mxu0 0.0
    %738 = vmatpush1.msra.mxu0 %v231
    %739 = vmatprep.subr.mxu0 0.0
    %740 = vmatpush1.msra.mxu0 %v230
    %741 = vmatprep.subr.mxu0 0.0
    %742 = vmatpush2.msra.mxu0 0.0
    %743 = vmatprep.subr.mxu0 0.0
    %744 = vmatpush2.msra.mxu0 0.0
    %745 = vmatprep.subr.mxu0 0.0
    %746 = vmatpush2.msra.mxu0 0.0
    %747 = vmatprep.subr.mxu0 0.0
    %748 = vmatpush2.msra.mxu0 0.0
    %749 = vmatprep.subr.mxu0 0.0
    %750 = vmatpush2.msra.mxu0 0.0
    %751 = vmatprep.subr.mxu0 0.0
    %752 = vmatpush2.msra.mxu0 0.0
    %753 = vmatprep.subr.mxu0 0.0
    %754 = vmatpush2.msra.mxu0 0.0
    %755 = vmatprep.subr.mxu0 0.0
    %756 = vmatpush2.msra.mxu0 0.0
    %757 = vmatprep.subr.mxu0 0.0
    %758 = vmatpush2.msra.mxu0 0.0
    %759 = vmatprep.subr.mxu0 0.0
    %760 = vmatpush2.msra.mxu0 0.0
    %761 = vmatprep.subr.mxu0 0.0
    %762 = vmatpush2.msra.mxu0 0.0
    %763 = vmatprep.subr.mxu0 0.0
    %764 = vmatpush2.msra.mxu0 0.0
    %765 = vmatprep.subr.mxu0 0.0
    %766 = vmatpush2.msra.mxu0 0.0
    %767 = vmatprep.subr.mxu0 0.0
    %768 = vmatpush2.msra.mxu0 0.0
    %769 = vmatprep.subr.mxu0 0.0
    %770 = vmatpush2.msra.mxu0 0.0
    %771 = vmatprep.subr.mxu0 0.0
    %772 = vmatpush2.msra.mxu0 0.0
    %773 = vmatprep.mubr.f32.mxu0 0.0
    %774 = vmatmul.mubr.f32.gmra.mxu0 %v706
    %v775 = vpop.f32.mrf.mxu0
    %v776 = vadd.f32 %v708, %v775
    %v777 = vpop.f32.mrf.mxu0
    %778 = vdwg.mxu0
    %v779 = vtanh.pop %v776
    %v780 = vsub.f32 %v779, %v706
    %v781 = vmul.f32 %v323, %v780
    %v782 = vadd.f32 %v706, %v781
    %s783 = scalar_lea.vmem [#allocation2], 56
    %v784 = vld [vmem:[%s783] sm:$0xff]
    %785 = vmatprep.subr.mxu0 0.0
    %786 = vmatpush1.msra.mxu0 %v245
    %787 = vmatprep.subr.mxu0 0.0
    %788 = vmatpush1.msra.mxu0 %v244
    %789 = vmatprep.subr.mxu0 0.0
    %790 = vmatpush1.msra.mxu0 %v243
    %791 = vmatprep.subr.mxu0 0.0
    %792 = vmatpush1.msra.mxu0 %v242
    %793 = vmatprep.subr.mxu0 0.0
    %794 = vmatpush1.msra.mxu0 %v241
    %795 = vmatprep.subr.mxu0 0.0
    %796 = vmatpush1.msra.mxu0 %v240
    %797 = vmatprep.subr.mxu0 0.0
    %798 = vmatpush1.msra.mxu0 %v239
    %799 = vmatprep.subr.mxu0 0.0
    %800 = vmatpush1.msra.mxu0 %v238
    %801 = vmatprep.subr.mxu0 0.0
    %802 = vmatpush1.msra.mxu0 %v237
    %803 = vmatprep.subr.mxu0 0.0
    %804 = vmatpush1.msra.mxu0 %v236
    %805 = vmatprep.subr.mxu0 0.0
    %806 = vmatpush1.msra.mxu0 %v235
    %807 = vmatprep.subr.mxu0 0.0
    %808 = vmatpush1.msra.mxu0 %v234
    %809 = vmatprep.subr.mxu0 0.0
    %810 = vmatpush1.msra.mxu0 %v233
    %811 = vmatprep.subr.mxu0 0.0
    %812 = vmatpush1.msra.mxu0 %v232
    %813 = vmatprep.subr.mxu0 0.0
    %814 = vmatpush1.msra.mxu0 %v231
    %815 = vmatprep.subr.mxu0 0.0
    %816 = vmatpush1.msra.mxu0 %v230
    %817 = vmatprep.subr.mxu0 0.0
    %818 = vmatpush2.msra.mxu0 0.0
    %819 = vmatprep.subr.mxu0 0.0
    %820 = vmatpush2.msra.mxu0 0.0
    %821 = vmatprep.subr.mxu0 0.0
    %822 = vmatpush2.msra.mxu0 0.0
    %823 = vmatprep.subr.mxu0 0.0
    %824 = vmatpush2.msra.mxu0 0.0
    %825 = vmatprep.subr.mxu0 0.0
    %826 = vmatpush2.msra.mxu0 0.0
    %827 = vmatprep.subr.mxu0 0.0
    %828 = vmatpush2.msra.mxu0 0.0
    %829 = vmatprep.subr.mxu0 0.0
    %830 = vmatpush2.msra.mxu0 0.0
    %831 = vmatprep.subr.mxu0 0.0
    %832 = vmatpush2.msra.mxu0 0.0
    %833 = vmatprep.subr.mxu0 0.0
    %834 = vmatpush2.msra.mxu0 0.0
    %835 = vmatprep.subr.mxu0 0.0
    %836 = vmatpush2.msra.mxu0 0.0
    %837 = vmatprep.subr.mxu0 0.0
    %838 = vmatpush2.msra.mxu0 0.0
    %839 = vmatprep.subr.mxu0 0.0
    %840 = vmatpush2.msra.mxu0 0.0
    %841 = vmatprep.subr.mxu0 0.0
    %842 = vmatpush2.msra.mxu0 0.0
    %843 = vmatprep.subr.mxu0 0.0
    %844 = vmatpush2.msra.mxu0 0.0
    %845 = vmatprep.subr.mxu0 0.0
    %846 = vmatpush2.msra.mxu0 0.0
    %847 = vmatprep.subr.mxu0 0.0
    %848 = vmatpush2.msra.mxu0 0.0
    %849 = vmatprep.mubr.f32.mxu0 0.0
    %850 = vmatmul.mubr.f32.gmra.mxu0 %v782
    %v851 = vpop.f32.mrf.mxu0
    %v852 = vadd.f32 %v784, %v851
    %v853 = vpop.f32.mrf.mxu0
    %854 = vdwg.mxu0
    %v855 = vtanh.pop %v852
    %v856 = vsub.f32 %v855, %v782
    %v857 = vmul.f32 %v323, %v856
    %v858 = vadd.f32 %v782, %v857
    %859 = vst [vmem:[#allocation9] sm:$0xff] %v858
    // Predicated region
    $region38: #{tpu_custom_call.1} parent=1 // pred_check
      _
    $region39: #{tpu_custom_call.1} parent=1 // pred_check_branch
      %861 = sbr.rel (0) target = $region41
    $region40: #{tpu_custom_call.1} parent=1 // pred_region
      %s863 = ssub.s32 128, 128
      %864 = vsyncadd [#allocation5], %s863
      %s866 = sshll.u32 [#allocation9], 4
      %s867 = int_to_ptr.vmem [resolvable:$true] %s866
      %869 = dma.vmem_to_hbm [thread:$0]  %s867, 128, %s5, [#allocation5]
    $region41: #{tpu_custom_call.1} parent=1 // pred_fallthru
      _
    // Predicated region
    $region42: #{tpu_custom_call.1} parent=1 // pred_check
      _
    $region43: #{tpu_custom_call.1} parent=1 // pred_check_branch
      %871 = sbr.rel (0) target = $region45
    $region44: #{tpu_custom_call.1} parent=1 // pred_region
      %872 = dma.done [#allocation5], 128
    $region45: #{tpu_custom_call.1} parent=1 // pred_fallthru
      _
    %873 = vsyncpa [#allocation4], 1
    %874 = vsyncpa [#allocation7], 1
    %875 = vsyncpa [#allocation5], 1

</llo_original>
